<compile_context>
chip_gen: v5e
topology: v5e:2x2
jax: 0.10.0
libtpu: 0.0.40
codegen_flags: <defaults>
</compile_context>

<pallas_src>
import functools

import jax
import jax.numpy as jnp
from jax import lax
from jax.experimental import pallas as pl
from jax.experimental.pallas import tpu as pltpu

LANES = 128
BLOCK_ROWS = 4096      # 4096*128 f32 = 2 MiB / input / pipeline buffer
CHUNK_ROWS = 128       # inner-loop chunk: 128*128 f32 = 64 KiB (stays in vregs)
MAX_SPLITS = 2         # leading "parallel" grid axis (both TCs on v7x)


def _bce_loss_values(x, t, *, binary_targets):
    """Element-wise clamped BCE loss values in f32 (matches torch BCE clamping)."""
    x = x.astype(jnp.float32)
    t = t.astype(jnp.float32)
    if binary_targets:
        # Single transcendental per element; valid only for t in {0, 1}.
        p = jnp.where(t > 0.5, x, 1.0 - x)
        return -jnp.maximum(jnp.log(p), jnp.float32(-100.0))
    # Clamp BEFORE the multiply so zero-valued x (e.g. padding) can't make 0 * -inf.
    log_x = jnp.maximum(jnp.log(x), jnp.float32(-100.0))
    log_1mx = jnp.maximum(jnp.log(1.0 - x), jnp.float32(-100.0))
    return -(log_1mx + t * (log_x - log_1mx))


def _bce_kernel(x_ref, t_ref, o_ref, acc_ref, *,
                rows, block_rows, chunk, steps_per_core, num_blocks,
                num_splits, whole_block, binary_targets):
    if whole_block:
        # Single block == full array (rows < BLOCK_ROWS). No masking, no loops.
        loss = _bce_loss_values(x_ref[...], t_ref[...],
                                binary_targets=binary_targets)
        o_ref[0, 0] = jnp.sum(loss)
        return

    c = pl.program_id(0)          # split index (one per TensorCore on v7x)
    i = pl.program_id(1)          # reduction step within this split
    block_idx = c * steps_per_core + i

    num_chunks = block_rows // chunk
    has_partial = (rows % block_rows) != 0
    needs_guard = (num_splits * steps_per_core) > num_blocks

    @pl.when(i == 0)
    def _():
        acc_ref[...] = jnp.zeros_like(acc_ref)

    def block_partial_sum(masked):
        row0 = block_idx * block_rows

        def chunk_sum(off, carry):
            x = x_ref[pl.ds(off, chunk), :]
            t = t_ref[pl.ds(off, chunk), :]
            loss = _bce_loss_values(x, t, binary_targets=binary_targets)
            if masked:
                # Only the final (partial) block runs this: zero out rows past `rows`
                # whose VMEM contents are undefined.
                rid = row0 + off + lax.broadcasted_iota(
                    jnp.int32, (chunk, LANES), 0)
                loss = jnp.where(rid < rows, loss, jnp.float32(0.0))
            # Cheap VPU tree-reduce of the chunk into an (8,128) vreg tile.
            return carry + jnp.sum(loss.reshape(chunk // 8, 8, LANES), axis=0)

        init = jnp.zeros((8, LANES), jnp.float32)
        if num_chunks == 1:
            return chunk_sum(0, init)
        return lax.fori_loop(
            0, num_chunks,
            lambda k, carry: chunk_sum(pl.multiple_of(k * chunk, chunk), carry),
            init)

    full_limit = num_blocks - 1 if has_partial else num_blocks
    if full_limit > 0:
        if has_partial or needs_guard:
            # Skip duplicated (clamped) blocks and the partial block on this path.
            @pl.when(block_idx < full_limit)
            def _():
                acc_ref[...] += block_partial_sum(masked=False)
        else:
            acc_ref[...] += block_partial_sum(masked=False)

    if has_partial:
        @pl.when(block_idx == num_blocks - 1)
        def _():
            acc_ref[...] += block_partial_sum(masked=True)

    @pl.when(i == pl.num_programs(1) - 1)
    def _():
        # One cross-lane/cross-sublane reduce per split, at the very end.
        o_ref[0, 0] = jnp.sum(acc_ref[...])


def weighted_bce_loss(xhat, target, weight=1.0, *, binary_targets=False):
    """mean(BCE(xhat, target)) * weight, computed with a Pallas TPU kernel.

    xhat, target: arrays of identical shape with values in [0, 1].
    binary_targets: opt-in fast path (1 log/element) valid when targets are {0, 1}.
    Returns a float32 scalar.
    """
    assert xhat.shape == target.shape
    n = xhat.size
    if n == 0:
        return jnp.float32(0.0)

    x_flat = xhat.reshape(-1)
    t_flat = target.reshape(-1)

    n_main = (n // LANES) * LANES
    tail = n - n_main

    tail_sum = None
    if tail:
        # <128 leftover elements: tiny plain-JAX reduction (reads only the tail).
        tail_sum = jnp.sum(_bce_loss_values(
            x_flat[n_main:], t_flat[n_main:], binary_targets=binary_targets))
        # TODO(synk): this prefix slice copies n_main elements when n % 128 != 0;
        # unavoidable without a 1-D-layout kernel, and rare for NN tensor sizes.
        x_flat = x_flat[:n_main]
        t_flat = t_flat[:n_main]

    total = None
    if n_main:
        rows = n_main // LANES
        # Lane-dense 2-D view: reshape of a contiguous flat array is free (no copy).
        x2 = x_flat.reshape(rows, LANES)
        t2 = t_flat.reshape(rows, LANES)

        whole_block = rows < BLOCK_ROWS
        if whole_block:
            block_rows, chunk = rows, rows   # single block == full array dims
        else:
            block_rows, chunk = BLOCK_ROWS, CHUNK_ROWS

        num_blocks = pl.cdiv(rows, block_rows)
        num_splits = MAX_SPLITS if num_blocks >= MAX_SPLITS else 1
        steps_per_core = pl.cdiv(num_blocks, num_splits)
        max_block = num_blocks - 1

        def in_index_map(c, i):
            # Clamp so the DMA always stays inside the array; duplicated logical
            # blocks are skipped by the in-kernel scalar guard.
            return (jnp.minimum(c * steps_per_core + i, max_block), 0)

        kernel = functools.partial(
            _bce_kernel, rows=rows, block_rows=block_rows, chunk=chunk,
            steps_per_core=steps_per_core, num_blocks=num_blocks,
            num_splits=num_splits, whole_block=whole_block,
            binary_targets=binary_targets)

        in_bytes = int(n_main) * (x2.dtype.itemsize + t2.dtype.itemsize)
        cost = pl.CostEstimate(
            flops=(5 if binary_targets else 7) * int(n_main),
            transcendentals=(1 if binary_targets else 2) * int(n_main),
            bytes_accessed=in_bytes + num_splits * 4)

        partials = pl.pallas_call(
            kernel,
            out_shape=jax.ShapeDtypeStruct((num_splits, 1), jnp.float32),
            grid_spec=pltpu.PrefetchScalarGridSpec(
                num_scalar_prefetch=0,
                grid=(num_splits, steps_per_core),
                in_specs=[
                    pl.BlockSpec((block_rows, LANES), in_index_map),
                    pl.BlockSpec((block_rows, LANES), in_index_map),
                ],
                out_specs=pl.BlockSpec((1, 1), lambda c, i: (c, 0),
                                       memory_space=pltpu.SMEM),
                scratch_shapes=[pltpu.VMEM((8, LANES), jnp.float32)],
            ),
            compiler_params=pltpu.CompilerParams(
                dimension_semantics=("parallel", "arbitrary"),
                vmem_limit_bytes=32 * 1024 * 1024,
            ),
            cost_estimate=cost,
        )(x2, t2)
        total = jnp.sum(partials)

    if tail_sum is not None:
        total = tail_sum if total is None else total + tail_sum

    # Finalize: mean over n, then the scalar loss weight.
    return total * jnp.float32(weight) * jnp.float32(1.0 / n)


def _reference_bce(xhat, target, weight=1.0):
    x = xhat.astype(jnp.float32)
    t = target.astype(jnp.float32)
    log_x = jnp.maximum(jnp.log(x), -100.0)
    log_1mx = jnp.maximum(jnp.log(1.0 - x), -100.0)
    return jnp.mean(-(t * log_x + (1.0 - t) * log_1mx)) * weight


if __name__ == "__main__":
    key = jax.random.PRNGKey(0)
    k1, k2, k3, k4 = jax.random.split(key, 4)

    weight = 2.5  # deterministic "module parameter" (scalar loss weight)

    # Main case: NCHW-like, batch=2, channels=4, spatial=16x16 (aligned: no pad/copy).
    shape = (2, 4, 16, 16)
    xhat = jax.nn.sigmoid(jax.random.normal(k1, shape, jnp.float32))    # probs in (0,1)
    target = (jax.random.uniform(k2, shape) > 0.5).astype(jnp.float32)  # {0,1} labels

    loss = jax.block_until_ready(weighted_bce_loss(xhat, target, weight=weight))
    ref = _reference_bce(xhat, target, weight=weight)
    assert jnp.allclose(loss, ref, rtol=1e-5, atol=1e-6), (loss, ref)

    # Binary-target fast path (single log per element) on the same inputs.
    loss_b = jax.block_until_ready(
        weighted_bce_loss(xhat, target, weight=weight, binary_targets=True))
    assert jnp.allclose(loss_b, ref, rtol=1e-5, atol=1e-6), (loss_b, ref)

    # Unaligned case with soft targets: exercises the plain-JAX tail + odd row count.
    shape2 = (3, 5, 7, 11)  # 1155 elements: 9 full lane-rows + 3 tail elements
    xhat2 = jax.nn.sigmoid(jax.random.normal(k3, shape2, jnp.float32))
    target2 = jax.random.uniform(k4, shape2)
    loss2 = jax.block_until_ready(weighted_bce_loss(xhat2, target2, weight=weight))
    ref2 = _reference_bce(xhat2, target2, weight=weight)
    assert jnp.allclose(loss2, ref2, rtol=1e-5, atol=1e-6), (loss2, ref2)

    print("KERNEL_OK")
</pallas_src>

<mosaic_0001>
module attributes {stable_mosaic.version = 11 : i64} {
  func.func @_bce_kernel(%arg0: i32, %arg1: i32, %arg2: memref<16x128xf32, #tpu.memory_space<vmem>>, %arg3: memref<16x128xf32, #tpu.memory_space<vmem>>, %arg4: memref<1x1xf32, #tpu.memory_space<smem>>, %arg5: memref<8x128xf32, #tpu.memory_space<vmem>>) attributes {dimension_semantics = [#tpu.dimension_semantics<parallel>, #tpu.dimension_semantics<arbitrary>], iteration_bounds = array<i64: 1, 1>, scalar_prefetch = 0 : i64, scratch_operands = 1 : i64, tpu.core_type = #tpu.core_type<tc>, window_params = [{transform_indices = @transform_0, window_bounds = array<i64: 16, 128>}, {transform_indices = @transform_1, window_bounds = array<i64: 16, 128>}, {transform_indices = @transform_2, window_bounds = array<i64: 1, 1>}]} {
    %c0 = arith.constant 0 : index
    %c0_0 = arith.constant 0 : index
    %0 = vector.load %arg2[%c0, %c0_0] : memref<16x128xf32, #tpu.memory_space<vmem>>, vector<16x128xf32>
    %c0_1 = arith.constant 0 : index
    %c0_2 = arith.constant 0 : index
    %1 = vector.load %arg3[%c0_1, %c0_2] : memref<16x128xf32, #tpu.memory_space<vmem>>, vector<16x128xf32>
    %2 = math.log %0 : vector<16x128xf32>
    %cst = arith.constant -1.000000e+02 : f32
    %3 = vector.broadcast %cst : f32 to vector<16x128xf32>
    %4 = arith.maximumf %2, %3 : vector<16x128xf32>
    %cst_3 = arith.constant 1.000000e+00 : f32
    %5 = vector.broadcast %cst_3 : f32 to vector<16x128xf32>
    %6 = arith.subf %5, %0 : vector<16x128xf32>
    %7 = math.log %6 : vector<16x128xf32>
    %cst_4 = arith.constant -1.000000e+02 : f32
    %8 = vector.broadcast %cst_4 : f32 to vector<16x128xf32>
    %9 = arith.maximumf %7, %8 : vector<16x128xf32>
    %10 = arith.subf %4, %9 : vector<16x128xf32>
    %11 = arith.mulf %1, %10 : vector<16x128xf32>
    %12 = arith.addf %9, %11 : vector<16x128xf32>
    %cst_5 = arith.constant 0.000000e+00 : f32
    %13 = vector.broadcast %cst_5 : f32 to vector<16x128xf32>
    %14 = arith.subf %13, %12 : vector<16x128xf32>
    %15 = vector.shape_cast %14 : vector<16x128xf32> to vector<1x16x128xf32>
    %cst_6 = arith.constant dense<0.000000e+00> : vector<1xf32>
    %16 = vector.multi_reduction <add>, %15, %cst_6 [1, 2] : vector<1x16x128xf32> to vector<1xf32>
    %17 = vector.shape_cast %16 : vector<1xf32> to vector<1x1x1xf32>
    %18 = vector.extract %17[0, 0, 0] : f32 from vector<1x1x1xf32>
    %c0_7 = arith.constant 0 : index
    %c0_8 = arith.constant 0 : index
    %19 = memref.load %arg4[%c0_7, %c0_8] : memref<1x1xf32, #tpu.memory_space<smem>>
    memref.store %18, %arg4[%c0_7, %c0_8] : memref<1x1xf32, #tpu.memory_space<smem>>
    return
  }
  func.func @transform_0(%arg0: i32, %arg1: i32) -> (i32, i32) {
    %c1_i32 = arith.constant 1 : i32
    %0 = arith.muli %arg0, %c1_i32 : i32
    %1 = arith.addi %0, %arg1 : i32
    %c0_i32 = arith.constant 0 : i32
    %2 = arith.minsi %1, %c0_i32 : i32
    %c0_i32_0 = arith.constant 0 : i32
    %c0_i32_1 = arith.constant 0 : i32
    return %2, %c0_i32_0 : i32, i32
  }
  func.func @transform_1(%arg0: i32, %arg1: i32) -> (i32, i32) {
    %c1_i32 = arith.constant 1 : i32
    %0 = arith.muli %arg0, %c1_i32 : i32
    %1 = arith.addi %0, %arg1 : i32
    %c0_i32 = arith.constant 0 : i32
    %2 = arith.minsi %1, %c0_i32 : i32
    %c0_i32_0 = arith.constant 0 : i32
    %c0_i32_1 = arith.constant 0 : i32
    return %2, %c0_i32_0 : i32, i32
  }
  func.func @transform_2(%arg0: i32, %arg1: i32) -> (i32, i32) {
    %c0_i32 = arith.constant 0 : i32
    %c0_i32_0 = arith.constant 0 : i32
    return %arg0, %c0_i32 : i32, i32
  }
}

</mosaic_0001>

<llo_original>
// kernel: tpu_custom_call.1
$region0: #{tpu_custom_call.1}
  #allocation0 [shape = 'u32[]', space=smem, size = 0x4, offset = 0x4, fixed_abs, tag = 'smem constant byte address 0x4 - core index']
  #allocation1 [shape = 'u32[72,128]{1,0:T(1,128)}', space=vmem, size = 0x9000, scoped, tag = 'internal scratch']
  #allocation2 [shape = 'f32[8,128]{1,0:T(8,128)}', space=vmem, size = 0x1000, scoped, tag = 'scratch operand']
  %s0 = inlined_call_operand.hbm [shape: f32[16,128], index: 0, kind: input, shape index: {}]
  %s1 = inlined_call_operand.hbm [shape: f32[16,128], index: 1, kind: input, shape index: {}]
  %s2 = inlined_call_operand.hbm [shape: f32[1,1], index: 2, kind: output, shape index: {}]
  %s3 = sld [smem:[#allocation0]]
  $region26: #{tpu_custom_call.1} parent=0
    _
  %s5 = ssub.s32 1, %s3
  %s6 = scalar_select 0, %s5, %s3
  $region1: #{tpu_custom_call.1} parent=0
    #allocation3 [shape = 'u8[8192]{0}', space=vmem, size = 0x2000, scoped, tag = 'input window, operand 0, single buffered']
    #allocation4 [shape = 's32[1]{0}', space=sflag, size = 0x4, scoped, tag = 'scoped memory for tpu_custom_call.1']
    #allocation5 [shape = 's32[1]{0}', space=sflag, size = 0x4, scoped, tag = 'scoped memory for tpu_custom_call.1']
    #allocation6 [shape = 'u8[8192]{0}', space=vmem, size = 0x2000, scoped, tag = 'input window, operand 1, single buffered']
    #allocation7 [shape = 's32[1]{0}', space=sflag, size = 0x4, scoped, tag = 'scoped memory for tpu_custom_call.1']
    #allocation8 [shape = 'u8[512]{0}', space=smem, size = 0x200, scoped, tag = 'output window, operand 0, single buffered']
    %7 = vsyncpa [#allocation4], 0
    %8 = vsyncpa [#allocation7], 0
    %9 = vsyncpa [#allocation5], 0
    // Predicated region
    $region2: #{tpu_custom_call.1} parent=1 // pred_check
      _
    $region3: #{tpu_custom_call.1} parent=1 // pred_check_branch
      %11 = sbr.rel (0) target = $region5
    $region4: #{tpu_custom_call.1} parent=1 // pred_region
      %s12 = sadd.s32 0, 0
      %p13 = scmp.lt.s32.totalorder %s12, 0
      %s14 = scalar_select %p13, %s12, 0
      %s15 = smul.u32 2, %s14
      %17 = vsyncadd [#allocation4], 0
      %s18 = smul.addr %s15, 8
      %s19 = scalar_lea.hbm %s0, %s18
      %s20 = sshll.u32 %s19, 4
      %s21 = int_to_ptr.hbm [resolvable:$true] %s20
      %s22 = sshll.u32 [#allocation3], 4
      %s23 = int_to_ptr.vmem [resolvable:$true] %s22
      %28 = dma.hbm_to_vmem [thread:$0]  %s21, 256, %s23, [#allocation4], 128, 128, 8
    $region5: #{tpu_custom_call.1} parent=1 // pred_fallthru
      _
    // Predicated region
    $region6: #{tpu_custom_call.1} parent=1 // pred_check
      _
    $region7: #{tpu_custom_call.1} parent=1 // pred_check_branch
      %30 = sbr.rel (0) target = $region9
    $region8: #{tpu_custom_call.1} parent=1 // pred_region
      %s31 = sadd.s32 0, 0
      %p32 = scmp.lt.s32.totalorder %s31, 0
      %s33 = scalar_select %p32, %s31, 0
      %s34 = smul.u32 2, %s33
      %36 = vsyncadd [#allocation7], 0
      %s37 = smul.addr %s34, 8
      %s38 = scalar_lea.hbm %s1, %s37
      %s39 = sshll.u32 %s38, 4
      %s40 = int_to_ptr.hbm [resolvable:$true] %s39
      %s41 = sshll.u32 [#allocation6], 4
      %s42 = int_to_ptr.vmem [resolvable:$true] %s41
      %47 = dma.hbm_to_vmem [thread:$0]  %s40, 256, %s42, [#allocation7], 128, 128, 8
    $region9: #{tpu_custom_call.1} parent=1 // pred_fallthru
      _
    // Predicated region
    $region10: #{tpu_custom_call.1} parent=1 // pred_check
      _
    $region11: #{tpu_custom_call.1} parent=1 // pred_check_branch
      %49 = sbr.rel (0) target = $region13
    $region12: #{tpu_custom_call.1} parent=1 // pred_region
      %51 = dma.done [#allocation4], 256
    $region13: #{tpu_custom_call.1} parent=1 // pred_fallthru
      _
    // Predicated region
    $region14: #{tpu_custom_call.1} parent=1 // pred_check
      _
    $region15: #{tpu_custom_call.1} parent=1 // pred_check_branch
      %53 = sbr.rel (0) target = $region17
    $region16: #{tpu_custom_call.1} parent=1 // pred_region
      %55 = dma.done [#allocation7], 256
    $region17: #{tpu_custom_call.1} parent=1 // pred_fallthru
      _
    %s56 = sadd.s32 0, 0
    %p57 = scmp.lt.s32.totalorder %s56, 0
    %s58 = scalar_select %p57, %s56, 0
    %s59 = smul.u32 2, %s58
    %s60 = sadd.s32 0, 0
    %p61 = scmp.lt.s32.totalorder %s60, 0
    %s62 = scalar_select %p61, %s60, 0
    %s63 = smul.u32 2, %s62
    %v64 = vld [vmem:[#allocation3] sm:$0xff]
    %v65 = vld [vmem:[#allocation3 + $0x8] sm:$0xff]
    %v66 = vld [vmem:[#allocation6] sm:$0xff]
    %v67 = vld [vmem:[#allocation6 + $0x8] sm:$0xff]
    %v68 = vlog2.pop %v64
    %v69 = vmul.f32 %v68, 0.6931472
    %v70 = vlog2.pop %v65
    %v71 = vmul.f32 %v70, 0.6931472
    %v72 = vmax.f32 %v69, -100.0
    %v73 = vmax.f32 %v71, -100.0
    %v74 = vsub.f32 1.0, %v64
    %v75 = vsub.f32 1.0, %v65
    %v76 = vlog2.pop %v74
    %v77 = vmul.f32 %v76, 0.6931472
    %v78 = vlog2.pop %v75
    %v79 = vmul.f32 %v78, 0.6931472
    %v80 = vmax.f32 %v77, -100.0
    %v81 = vmax.f32 %v79, -100.0
    %v82 = vsub.f32 %v72, %v80
    %v83 = vsub.f32 %v73, %v81
    %v84 = vmul.f32 %v66, %v82
    %v85 = vmul.f32 %v67, %v83
    %v86 = vadd.f32 %v80, %v84
    %v87 = vadd.f32 %v81, %v85
    %v88 = vsub.f32 0.0, %v86
    %v89 = vsub.f32 0.0, %v87
    %v90 = vadd.f32 %v88, %v89
    %91 = vadd.xlane.f32.xlu0 %v90
    %v92 = vpop.xlane.xlu0 %91
    %v93 = vrot.slane %v92, 4
    %v94 = vadd.f32 %v92, %v93
    %v95 = vrot.slane %v94, 2
    %v96 = vadd.f32 %v94, %v95
    %v97 = vrot.slane %v96, 1
    %v98 = vadd.f32 %v96, %v97
    %s99 = vtos %v98
    %s100 = scalar_lea.smem [#allocation8], 0
    %101 = sst [smem:[%s100]] %s99
    // Predicated region
    $region18: #{tpu_custom_call.1} parent=1 // pred_check
      _
    $region19: #{tpu_custom_call.1} parent=1 // pred_check_branch
      %103 = sbr.rel (0) target = $region21
    $region20: #{tpu_custom_call.1} parent=1 // pred_region
      %105 = vsyncadd [#allocation5], 0
      %s107 = sshll.u32 %s2, 4
      %s108 = int_to_ptr.hbm [resolvable:$true] %s107
      %110 = dma.smem_to_hbm [#allocation8], 16, %s108, [#allocation5]
    $region21: #{tpu_custom_call.1} parent=1 // pred_fallthru
      _
    // Predicated region
    $region22: #{tpu_custom_call.1} parent=1 // pred_check
      _
    $region23: #{tpu_custom_call.1} parent=1 // pred_check_branch
      %112 = sbr.rel (0) target = $region25
    $region24: #{tpu_custom_call.1} parent=1 // pred_region
      %114 = dma.done [#allocation5], 16
    $region25: #{tpu_custom_call.1} parent=1 // pred_fallthru
      _
    %115 = sfence
    %116 = vsyncpa [#allocation4], 1
    %117 = vsyncpa [#allocation7], 1
    %118 = vsyncpa [#allocation5], 1

</llo_original>
